<compile_context>
chip_gen: v7x
topology: tpu7x:2x2x1
jax: 0.10.0
libtpu: 0.0.40
codegen_flags: <defaults>
</compile_context>

<pallas_src>
import functools
import numpy as np

import jax
import jax.numpy as jnp
from jax.experimental import pallas as pl
from jax.experimental.pallas import tpu as pltpu


def make_leaky_relu_coeffs(order: int, a: float) -> np.ndarray:
    """Replicates leakyReluX.__init__: polyfit of leaky-ReLU over [-a, a)."""
    xs = np.arange(-a, a, 0.001)
    ys = np.where(xs > 0, xs, xs * 0.1)
    coeffs = np.flip(np.polyfit(xs, ys, order))
    return np.ascontiguousarray(coeffs)  # coeffs[i] multiplies x**i


def _leaky_relu_x_kernel(x_ref, o_ref, *, coeffs):
    # Elementwise polynomial via Horner's rule; accumulate in f32, cast on store.
    x = x_ref[...].astype(jnp.float32)
    out = jnp.full_like(x, jnp.float32(coeffs[-1]))
    for c in reversed(coeffs[:-1]):
        out = out * x + jnp.float32(c)
    o_ref[...] = out.astype(o_ref.dtype)


def _pick_lane_width(n: int) -> int:
    # Prefer a lane-dense last dim (large multiple of 128) that divides n,
    # so no padding copy is needed; otherwise fall back to 128 (pad <=127 elems).
    for w in (4096, 2048, 1024, 512, 256):
        if n >= w and n % w == 0:
            return w
    return 128


def leaky_relu_x_pallas(x: jax.Array, order: int, a: float) -> jax.Array:
    if order < 2 or order > 10:
        raise SystemExit("Order can't be <2 or >10")

    coeffs = tuple(float(c) for c in make_leaky_relu_coeffs(order, a))

    orig_shape = x.shape
    dtype = x.dtype
    itemsize = jnp.dtype(dtype).itemsize
    # Minimum sublane multiple for the second-to-last block dim (f32/bf16/int8).
    sub_mult = {4: 8, 2: 16, 1: 32}.get(itemsize, 8)

    xf = x.reshape(-1)
    n = xf.shape[0]

    lane = _pick_lane_width(n)
    n_pad = pl.cdiv(n, lane) * lane
    if n_pad != n:
        xf = jnp.pad(xf, (0, n_pad - n))
    rows = n_pad // lane
    x2d = xf.reshape(rows, lane)

    # ~2 MiB per buffer: amortizes the ~0.35us per-step overhead while keeping
    # double-buffered input + output well under v7x's 32 MiB scoped VMEM.
    target_tile_bytes = 2 * 1024 * 1024
    max_block_rows = max(sub_mult, target_tile_bytes // (lane * itemsize))
    if rows <= max_block_rows:
        block_rows = rows                      # full-dim block, single grid step
    else:
        block_rows = (max_block_rows // sub_mult) * sub_mult
    grid = (pl.cdiv(rows, block_rows),)        # partial last block handled by Pallas

    kernel = functools.partial(_leaky_relu_x_kernel, coeffs=coeffs)

    out2d = pl.pallas_call(
        kernel,
        out_shape=jax.ShapeDtypeStruct((rows, lane), dtype),
        grid_spec=pltpu.PrefetchScalarGridSpec(
            num_scalar_prefetch=0,
            grid=grid,
            in_specs=[pl.BlockSpec((block_rows, lane), lambda i: (i, 0))],
            out_specs=pl.BlockSpec((block_rows, lane), lambda i: (i, 0)),
        ),
        compiler_params=pltpu.CompilerParams(
            dimension_semantics=("parallel",)),
        cost_estimate=pl.CostEstimate(
            flops=2 * order * n_pad,
            transcendentals=0,
            bytes_accessed=2 * n_pad * itemsize),
    )(x2d)

    out = out2d.reshape(-1)[:n].reshape(orig_shape)
    return out


if __name__ == "__main__":
    order = 4
    a = 5.0

    key = jax.random.PRNGKey(0)
    x = jax.random.normal(key, (2, 4, 16, 16), dtype=jnp.float32)

    out = leaky_relu_x_pallas(x, order=order, a=a)
    out = jax.block_until_ready(out)

    # Reference: same accumulation order as the PyTorch forward loop.
    coeffs = make_leaky_relu_coeffs(order, a)
    ref = jnp.zeros_like(x)
    for i, c in enumerate(coeffs):
        ref = ref + jnp.float32(c) * x ** i

    assert out.shape == x.shape and out.dtype == x.dtype
    np.testing.assert_allclose(np.asarray(out), np.asarray(ref),
                               rtol=1e-5, atol=1e-5)
    print("KERNEL_OK")
</pallas_src>

<mosaic_0001>
module attributes {stable_mosaic.version = 11 : i64} {
  func.func @_leaky_relu_x_kernel(%arg0: i32, %arg1: memref<1x2048xf32, #tpu.memory_space<vmem>>, %arg2: memref<1x2048xf32, #tpu.memory_space<vmem>>) attributes {dimension_semantics = [#tpu.dimension_semantics<parallel>], iteration_bounds = array<i64: 1>, scalar_prefetch = 0 : i64, scratch_operands = 0 : i64, tpu.core_type = #tpu.core_type<tc>, window_params = [{transform_indices = @transform_0, window_bounds = array<i64: 1, 2048>}, {transform_indices = @transform_1, window_bounds = array<i64: 1, 2048>}]} {
    %c0 = arith.constant 0 : index
    %c0_0 = arith.constant 0 : index
    %0 = vector.load %arg1[%c0, %c0_0] : memref<1x2048xf32, #tpu.memory_space<vmem>>, vector<1x2048xf32>
    %cst = arith.constant -0.0029531254 : f32
    %1 = vector.broadcast %cst : f32 to vector<1x2048xf32>
    %2 = arith.mulf %1, %0 : vector<1x2048xf32>
    %cst_1 = arith.constant -1.96875021E-6 : f32
    %3 = vector.broadcast %cst_1 : f32 to vector<1x2048xf32>
    %4 = arith.addf %2, %3 : vector<1x2048xf32>
    %5 = arith.mulf %4, %0 : vector<1x2048xf32>
    %cst_2 = arith.constant 0.147656262 : f32
    %6 = vector.broadcast %cst_2 : f32 to vector<1x2048xf32>
    %7 = arith.addf %5, %6 : vector<1x2048xf32>
    %8 = arith.mulf %7, %0 : vector<1x2048xf32>
    %cst_3 = arith.constant 0.550021112 : f32
    %9 = vector.broadcast %cst_3 : f32 to vector<1x2048xf32>
    %10 = arith.addf %8, %9 : vector<1x2048xf32>
    %11 = arith.mulf %10, %0 : vector<1x2048xf32>
    %cst_4 = arith.constant 0.263671845 : f32
    %12 = vector.broadcast %cst_4 : f32 to vector<1x2048xf32>
    %13 = arith.addf %11, %12 : vector<1x2048xf32>
    %c0_5 = arith.constant 0 : index
    %c0_6 = arith.constant 0 : index
    %14 = vector.load %arg2[%c0_5, %c0_6] : memref<1x2048xf32, #tpu.memory_space<vmem>>, vector<1x2048xf32>
    tpu.vector_store %arg2[%c0_5, %c0_6], %13 {strides = array<i32>} : memref<1x2048xf32, #tpu.memory_space<vmem>>, vector<1x2048xf32>,
    return
  }
  func.func @transform_0(%arg0: i32) -> (i32, i32) {
    %c0_i32 = arith.constant 0 : i32
    %c0_i32_0 = arith.constant 0 : i32
    return %arg0, %c0_i32 : i32, i32
  }
  func.func @transform_1(%arg0: i32) -> (i32, i32) {
    %c0_i32 = arith.constant 0 : i32
    %c0_i32_0 = arith.constant 0 : i32
    return %arg0, %c0_i32 : i32, i32
  }
}

</mosaic_0001>

<llo_original>
// kernel: tpu_custom_call.1
$region0: #{tpu_custom_call.1}
  #allocation0 [shape = 'u32[]', space=smem, size = 0x4, offset = 0x4, fixed_abs, tag = 'smem constant byte address 0x4 - core index']
  #allocation1 [shape = 'u32[144,128]{1,0:T(1,128)}', space=vmem, size = 0x12000, scoped, tag = 'internal scratch']
  %s0 = inlined_call_operand.hbm [shape: f32[1,2048], index: 0, kind: input, shape index: {}]
  %s1 = inlined_call_operand.hbm [shape: f32[1,2048], index: 1, kind: output, shape index: {}]
  %s2 = sld [smem:[#allocation0]]
  $region18: #{tpu_custom_call.1} parent=0
    _
  %s4 = ssub.s32 1, %s2
  %s5 = scalar_select 0, %s4, %s2
  $region1: #{tpu_custom_call.1} parent=0
    #allocation2 [shape = 'u8[8192]{0}', space=vmem, size = 0x2000, scoped, tag = 'input window, operand 0, single buffered']
    #allocation3 [shape = 's32[1]{0}', space=sflag, size = 0x4, scoped, tag = 'scoped memory for tpu_custom_call.1']
    #allocation4 [shape = 's32[1]{0}', space=sflag, size = 0x4, scoped, tag = 'scoped memory for tpu_custom_call.1']
    #allocation5 [shape = 'u8[8192]{0}', space=vmem, size = 0x2000, scoped, tag = 'output window, operand 0, single buffered']
    %6 = vsyncpa [#allocation3], 0
    %7 = vsyncpa [#allocation4], 0
    // Predicated region
    $region2: #{tpu_custom_call.1} parent=1 // pred_check
      _
    $region3: #{tpu_custom_call.1} parent=1 // pred_check_branch
      %9 = sbr.rel (0) target = $region5
    $region4: #{tpu_custom_call.1} parent=1 // pred_region
      %s11 = ssub.s32 256, 256
      %12 = vsyncadd [#allocation3], %s11
      %s14 = sshll.u32 [#allocation2], 4
      %s15 = int_to_ptr.vmem [resolvable:$true] %s14
      %17 = dma.hbm_to_vmem [thread:$0]  %s0, 256, %s15, [#allocation3]
    $region5: #{tpu_custom_call.1} parent=1 // pred_fallthru
      _
    // Predicated region
    $region6: #{tpu_custom_call.1} parent=1 // pred_check
      _
    $region7: #{tpu_custom_call.1} parent=1 // pred_check_branch
      %19 = sbr.rel (0) target = $region9
    $region8: #{tpu_custom_call.1} parent=1 // pred_region
      %20 = dma.done [#allocation3], 256
    $region9: #{tpu_custom_call.1} parent=1 // pred_fallthru
      _
    %v21 = vld [vmem:[#allocation2] sm:$0xff]
    %v22 = vld [vmem:[#allocation2 + $0x8] sm:$0xff]
    %v23 = vmul.f32 %v21, -0.0029531254
    %v24 = vmul.f32 %v22, -0.0029531254
    %v25 = vadd.f32 %v23, -1.9687502e-06
    %v26 = vadd.f32 %v24, -1.9687502e-06
    %v27 = vmul.f32 %v25, %v21
    %v28 = vmul.f32 %v26, %v22
    %v29 = vadd.f32 %v27, 0.14765626
    %v30 = vadd.f32 %v28, 0.14765626
    %v31 = vmul.f32 %v29, %v21
    %v32 = vmul.f32 %v30, %v22
    %v33 = vadd.f32 %v31, 0.5500211
    %v34 = vadd.f32 %v32, 0.5500211
    %v35 = vmul.f32 %v33, %v21
    %v36 = vmul.f32 %v34, %v22
    %v37 = vadd.f32 %v35, 0.26367185
    %v38 = vadd.f32 %v36, 0.26367185
    %39 = vst [vmem:[#allocation5] sm:$0xff] %v37
    %40 = vst [vmem:[#allocation5 + $0x8] sm:$0xff] %v38
    // Predicated region
    $region10: #{tpu_custom_call.1} parent=1 // pred_check
      _
    $region11: #{tpu_custom_call.1} parent=1 // pred_check_branch
      %42 = sbr.rel (0) target = $region13
    $region12: #{tpu_custom_call.1} parent=1 // pred_region
      %s44 = ssub.s32 256, 256
      %45 = vsyncadd [#allocation4], %s44
      %s47 = sshll.u32 [#allocation5], 4
      %s48 = int_to_ptr.vmem [resolvable:$true] %s47
      %50 = dma.vmem_to_hbm [thread:$0]  %s48, 256, %s1, [#allocation4]
    $region13: #{tpu_custom_call.1} parent=1 // pred_fallthru
      _
    // Predicated region
    $region14: #{tpu_custom_call.1} parent=1 // pred_check
      _
    $region15: #{tpu_custom_call.1} parent=1 // pred_check_branch
      %52 = sbr.rel (0) target = $region17
    $region16: #{tpu_custom_call.1} parent=1 // pred_region
      %53 = dma.done [#allocation4], 256
    $region17: #{tpu_custom_call.1} parent=1 // pred_fallthru
      _
    %54 = vsyncpa [#allocation3], 1
    %55 = vsyncpa [#allocation4], 1

</llo_original>
